<compile_context>
chip_gen: v5e
topology: v5e:2x2
jax: 0.10.0
libtpu: 0.0.40
codegen_flags: <defaults>
</compile_context>

<pallas_src>
import jax
import jax.numpy as jnp
import numpy as np
from jax.experimental import pallas as pl
from jax.experimental.pallas import tpu as pltpu

NUM_INS = 2
NUM_OUTS = 1
HIDDEN = (16, 16)
NEG_SLOPE = 0.01  # PyTorch nn.LeakyReLU default


def _leaky_relu(x):
    # maximum(x, a*x) == where(x > 0, x, a*x) for 0 < a < 1; one fewer VALU op.
    return jnp.maximum(x, NEG_SLOPE * x)


def _subnet_kernel(x_ref, wpack_ref, w2_ref, w3_ref, b3_ref, o_ref):
    # x_ref   : (2, TILE)   features on sublanes, samples on lanes (compute dtype)
    # wpack   : (16, 4)     cols [W1[:,0], W1[:,1], b1, b2]       (compute dtype)
    # w2_ref  : (16, 16)    torch (out, in) layout                (compute dtype)
    # w3_ref  : (1, 16)     W3 row                                (compute dtype)
    # b3_ref  : (1, 1)      f32
    # o_ref   : (1, TILE)   f32
    cdt = x_ref.dtype
    x = x_ref[...]                           # (2, TILE)
    w1 = wpack_ref[:, 0:2]                   # (16, 2)
    b1 = wpack_ref[:, 2:3]                   # (16, 1)
    b2 = wpack_ref[:, 3:4]                   # (16, 1)

    # Layer 1 (2 -> 16): MXU (K=2 efficiency is irrelevant, the slot has slack).
    h = _leaky_relu(jnp.dot(w1, x, preferred_element_type=cdt) + b1)     # (16, TILE)

    # Layer 2 (16 -> 16): MXU.
    h = _leaky_relu(jnp.dot(w2_ref[...], h, preferred_element_type=cdt) + b2)

    # Layer 3 (16 -> 1): MXU (1,16)@(16,TILE); only +b3 and LeakyReLU on the VPU.
    y = jnp.dot(w3_ref[...], h, preferred_element_type=jnp.float32) + b3_ref[...]
    o_ref[...] = _leaky_relu(y).astype(o_ref.dtype)                      # (1, TILE)


def _round_up(x, m):
    return ((x + m - 1) // m) * m


def _cdiv(a, b):
    return (a + b - 1) // b


def _choose_tile(n, max_tile):
    # Practical ceiling 65536: keeps per-step VMEM (double-buffered I/O blocks +
    # (16, TILE) intermediates) comfortably under the 32 MiB scoped default,
    # including on v7x (64 MiB physical VMEM).
    max_tile = min(max_tile, 65536)
    n128 = _round_up(max(n, 1), 128)
    tile = min(_round_up(max_tile, 128), n128)
    steps = _cdiv(n128, tile)
    # Prefer an even step count so v7x's two TensorCores get balanced work.
    if steps % 2 == 1 and tile > 128:
        even_tile = _round_up(_cdiv(n128, steps + 1), 128)
        if even_tile >= 128 and _cdiv(n128, even_tile) % 2 == 0:
            tile = even_tile
    return tile


def _default_compute_dtype():
    # bf16 VALU exists on v6e / v7x; older chips (v5e and earlier) emulate bf16
    # elementwise, so keep f32 activations there.  MXU accumulation is f32 in
    # all cases.
    try:
        kind = jax.devices()[0].device_kind.lower()
    except Exception:
        return jnp.float32
    if "v6" in kind or "v7" in kind or "7x" in kind:
        return jnp.bfloat16
    return jnp.float32


def subnet_forward(x, params, *, max_tile=32768, compute_dtype=None):
    """x: (b, s, s, 2) float32 -> (b, s, s) float32."""
    b, s, s2, dim = x.shape
    assert s == s2 and dim == NUM_INS
    n = b * s * s
    h1, h2 = HIDDEN

    if compute_dtype is None:
        compute_dtype = _default_compute_dtype()

    tile = _choose_tile(n, max_tile)
    grid = _cdiv(n, tile)
    n_pad = grid * tile

    (w1, b1), (w2, b2), (w3, b3) = params     # torch layout: w (out, in), b (out,)

    # Feature-major input (2, n_pad): samples along the lane axis.  Transpose,
    # cast and pad are produced in one expression; allow_input_fusion lets XLA
    # fuse this producer into the pallas_call operand (no extra HBM round trip).
    x_t = x.reshape(n, NUM_INS).T.astype(compute_dtype)
    if n_pad != n:
        x_t = jnp.pad(x_t, ((0, 0), (0, n_pad - n)))

    wpack = jnp.concatenate(
        [w1, b1.reshape(h1, 1), b2.reshape(h2, 1)], axis=1
    ).astype(compute_dtype)                              # (16, 4)
    w2c = w2.astype(compute_dtype)                       # (16, 16)
    w3r = w3.reshape(NUM_OUTS, h2).astype(compute_dtype) # (1, 16)
    b3c = b3.reshape(1, 1).astype(jnp.float32)           # (1, 1)

    out = pl.pallas_call(
        _subnet_kernel,
        out_shape=jax.ShapeDtypeStruct((1, n_pad), jnp.float32),
        grid_spec=pltpu.PrefetchScalarGridSpec(
            num_scalar_prefetch=0,
            grid=(grid,),
            in_specs=[
                pl.BlockSpec((NUM_INS, tile), lambda i: (0, i)),
                pl.BlockSpec((h1, 4), lambda i: (0, 0)),
                pl.BlockSpec((h2, h1), lambda i: (0, 0)),
                pl.BlockSpec((NUM_OUTS, h2), lambda i: (0, 0)),
                pl.BlockSpec((1, 1), lambda i: (0, 0)),
            ],
            out_specs=pl.BlockSpec((1, tile), lambda i: (0, i)),
        ),
        compiler_params=pltpu.CompilerParams(
            dimension_semantics=("parallel",),
            allow_input_fusion=[True, False, False, False, False],
        ),
    )(x_t, wpack, w2c, w3r, b3c)

    return out[0, :n].reshape(b, s, s)


def init_params(key):
    """PyTorch nn.Linear default init: U(-1/sqrt(fan_in), 1/sqrt(fan_in)); torch (out, in) layout."""
    sizes = [NUM_INS] + list(HIDDEN) + [NUM_OUTS]
    params = []
    for i in range(len(sizes) - 1):
        fan_in, fan_out = sizes[i], sizes[i + 1]
        key, kw, kb = jax.random.split(key, 3)
        bound = 1.0 / np.sqrt(float(fan_in))
        w = jax.random.uniform(kw, (fan_out, fan_in), jnp.float32, -bound, bound)
        b = jax.random.uniform(kb, (fan_out,), jnp.float32, -bound, bound)
        params.append((w, b))
    return params


def reference_forward(x, params):
    """float64 numpy reference (independent of TPU matmul/activation precision)."""
    b, s, _, _ = x.shape
    h = np.asarray(x, dtype=np.float64).reshape(-1, NUM_INS)
    for w, bias in params:
        h = h @ np.asarray(w, dtype=np.float64).T + np.asarray(bias, dtype=np.float64)
        h = np.where(h > 0, h, NEG_SLOPE * h)
    return h.reshape(b, s, s)


if __name__ == "__main__":
    key = jax.random.PRNGKey(0)
    kx, kp = jax.random.split(key)

    b, s = 2, 16
    x = jax.random.normal(kx, (b, s, s, NUM_INS), dtype=jnp.float32)
    params = init_params(kp)

    compute_dtype = _default_compute_dtype()
    out = subnet_forward(x, params, compute_dtype=compute_dtype)
    out = jax.block_until_ready(out)

    ref = reference_forward(x, params)
    assert out.shape == (b, s, s)
    # The matmuls run on the MXU with default precision (bf16 passes); on
    # v6e/v7x the activations are additionally bf16, so widen tolerance there.
    tol = 5e-3 if compute_dtype == jnp.float32 else 3e-2
    np.testing.assert_allclose(np.asarray(out), ref, atol=tol, rtol=tol)

    print("KERNEL_OK")
</pallas_src>

<mosaic_0001>
module attributes {stable_mosaic.version = 11 : i64} {
  func.func @_subnet_kernel(%arg0: i32, %arg1: memref<2x256xf32, #tpu.memory_space<vmem>>, %arg2: memref<16x4xf32, #tpu.memory_space<vmem>>, %arg3: memref<16x16xf32, #tpu.memory_space<vmem>>, %arg4: memref<1x16xf32, #tpu.memory_space<vmem>>, %arg5: memref<1x1xf32, #tpu.memory_space<vmem>>, %arg6: memref<1x256xf32, #tpu.memory_space<vmem>>) attributes {dimension_semantics = [#tpu.dimension_semantics<parallel>], iteration_bounds = array<i64: 2>, scalar_prefetch = 0 : i64, scratch_operands = 0 : i64, tpu.core_type = #tpu.core_type<tc>, window_params = [{transform_indices = @transform_0, window_bounds = array<i64: 2, 256>}, {pipeline_mode = #tpu.pipeline_mode<synchronous>, transform_indices = @transform_1, window_bounds = array<i64: 16, 4>}, {pipeline_mode = #tpu.pipeline_mode<synchronous>, transform_indices = @transform_2, window_bounds = array<i64: 16, 16>}, {pipeline_mode = #tpu.pipeline_mode<synchronous>, transform_indices = @transform_3, window_bounds = array<i64: 1, 16>}, {pipeline_mode = #tpu.pipeline_mode<synchronous>, transform_indices = @transform_4, window_bounds = array<i64: 1, 1>}, {transform_indices = @transform_5, window_bounds = array<i64: 1, 256>}]} {
    %c0 = arith.constant 0 : index
    %c0_0 = arith.constant 0 : index
    %0 = vector.load %arg1[%c0, %c0_0] : memref<2x256xf32, #tpu.memory_space<vmem>>, vector<2x256xf32>
    %c0_1 = arith.constant 0 : index
    %c0_2 = arith.constant 0 : index
    %1 = vector.load %arg2[%c0_1, %c0_2] : memref<16x4xf32, #tpu.memory_space<vmem>>, vector<16x2xf32>
    %c0_3 = arith.constant 0 : index
    %c2 = arith.constant 2 : index
    %2 = vector.load %arg2[%c0_3, %c2] : memref<16x4xf32, #tpu.memory_space<vmem>>, vector<16x1xf32>
    %c0_4 = arith.constant 0 : index
    %c3 = arith.constant 3 : index
    %3 = vector.load %arg2[%c0_4, %c3] : memref<16x4xf32, #tpu.memory_space<vmem>>, vector<16x1xf32>
    %cst = arith.constant dense<0.000000e+00> : vector<16x256xf32>
    %4 = tpu.matmul %1, %0, %cst {dimension_numbers = #tpu.dot_dimension_numbers<[1], [0], [0], [1], [0, 0, 1, 1], [], []>} : vector<16x2xf32>, vector<2x256xf32>, vector<16x256xf32> -> vector<16x256xf32>
    %5 = vector.broadcast %2 : vector<16x1xf32> to vector<16x256xf32>
    %6 = arith.addf %4, %5 : vector<16x256xf32>
    %cst_5 = arith.constant 0.00999999977 : f32
    %7 = vector.broadcast %cst_5 : f32 to vector<16x256xf32>
    %8 = arith.mulf %7, %6 : vector<16x256xf32>
    %9 = arith.maximumf %6, %8 : vector<16x256xf32>
    %c0_6 = arith.constant 0 : index
    %c0_7 = arith.constant 0 : index
    %10 = vector.load %arg3[%c0_6, %c0_7] : memref<16x16xf32, #tpu.memory_space<vmem>>, vector<16x16xf32>
    %cst_8 = arith.constant dense<0.000000e+00> : vector<16x256xf32>
    %11 = tpu.matmul %10, %9, %cst_8 {dimension_numbers = #tpu.dot_dimension_numbers<[1], [0], [0], [1], [0, 0, 1, 1], [], []>} : vector<16x16xf32>, vector<16x256xf32>, vector<16x256xf32> -> vector<16x256xf32>
    %12 = vector.broadcast %3 : vector<16x1xf32> to vector<16x256xf32>
    %13 = arith.addf %11, %12 : vector<16x256xf32>
    %cst_9 = arith.constant 0.00999999977 : f32
    %14 = vector.broadcast %cst_9 : f32 to vector<16x256xf32>
    %15 = arith.mulf %14, %13 : vector<16x256xf32>
    %16 = arith.maximumf %13, %15 : vector<16x256xf32>
    %c0_10 = arith.constant 0 : index
    %c0_11 = arith.constant 0 : index
    %17 = vector.load %arg4[%c0_10, %c0_11] : memref<1x16xf32, #tpu.memory_space<vmem>>, vector<1x16xf32>
    %cst_12 = arith.constant dense<0.000000e+00> : vector<1x256xf32>
    %18 = tpu.matmul %17, %16, %cst_12 {dimension_numbers = #tpu.dot_dimension_numbers<[1], [0], [0], [1], [0, 0, 1, 1], [], []>} : vector<1x16xf32>, vector<16x256xf32>, vector<1x256xf32> -> vector<1x256xf32>
    %c0_13 = arith.constant 0 : index
    %c0_14 = arith.constant 0 : index
    %19 = vector.load %arg5[%c0_13, %c0_14] : memref<1x1xf32, #tpu.memory_space<vmem>>, vector<1x1xf32>
    %20 = vector.broadcast %19 : vector<1x1xf32> to vector<1x256xf32>
    %21 = arith.addf %18, %20 : vector<1x256xf32>
    %cst_15 = arith.constant 0.00999999977 : f32
    %22 = vector.broadcast %cst_15 : f32 to vector<1x256xf32>
    %23 = arith.mulf %22, %21 : vector<1x256xf32>
    %24 = arith.maximumf %21, %23 : vector<1x256xf32>
    %c0_16 = arith.constant 0 : index
    %c0_17 = arith.constant 0 : index
    %25 = vector.load %arg6[%c0_16, %c0_17] : memref<1x256xf32, #tpu.memory_space<vmem>>, vector<1x256xf32>
    tpu.vector_store %arg6[%c0_16, %c0_17], %24 {strides = array<i32>} : memref<1x256xf32, #tpu.memory_space<vmem>>, vector<1x256xf32>,
    return
  }
  func.func @transform_0(%arg0: i32) -> (i32, i32) {
    %c0_i32 = arith.constant 0 : i32
    %c0_i32_0 = arith.constant 0 : i32
    return %c0_i32, %arg0 : i32, i32
  }
  func.func @transform_1(%arg0: i32) -> (i32, i32) {
    %c0_i32 = arith.constant 0 : i32
    %c0_i32_0 = arith.constant 0 : i32
    %c0_i32_1 = arith.constant 0 : i32
    return %c0_i32, %c0_i32_0 : i32, i32
  }
  func.func @transform_2(%arg0: i32) -> (i32, i32) {
    %c0_i32 = arith.constant 0 : i32
    %c0_i32_0 = arith.constant 0 : i32
    %c0_i32_1 = arith.constant 0 : i32
    return %c0_i32, %c0_i32_0 : i32, i32
  }
  func.func @transform_3(%arg0: i32) -> (i32, i32) {
    %c0_i32 = arith.constant 0 : i32
    %c0_i32_0 = arith.constant 0 : i32
    %c0_i32_1 = arith.constant 0 : i32
    return %c0_i32, %c0_i32_0 : i32, i32
  }
  func.func @transform_4(%arg0: i32) -> (i32, i32) {
    %c0_i32 = arith.constant 0 : i32
    %c0_i32_0 = arith.constant 0 : i32
    %c0_i32_1 = arith.constant 0 : i32
    return %c0_i32, %c0_i32_0 : i32, i32
  }
  func.func @transform_5(%arg0: i32) -> (i32, i32) {
    %c0_i32 = arith.constant 0 : i32
    %c0_i32_0 = arith.constant 0 : i32
    return %c0_i32, %arg0 : i32, i32
  }
}

</mosaic_0001>

<llo_original>
// kernel: tpu_custom_call.1
$region0: #{tpu_custom_call.1}
  #allocation0 [shape = 'u32[]', space=smem, size = 0x4, offset = 0x4, fixed_abs, tag = 'smem constant byte address 0x4 - core index']
  #allocation1 [shape = 'u32[72,128]{1,0:T(1,128)}', space=vmem, size = 0x9000, scoped, tag = 'internal scratch']
  #allocation2 [shape = 'f32[1,1]{1,0:T(1,128)S(1)}', space=vmem, size = 0x200, scoped, tag = 'scoped memory for tpu_custom_call.1']
  %s0 = inlined_call_operand.hbm [shape: f32[2,512], index: 0, kind: input, shape index: {}]
  %s1 = inlined_call_operand.vmem [shape: f32[16,4], index: 1, kind: input, shape index: {}]
  %s2 = inlined_call_operand.vmem [shape: f32[16,16], index: 2, kind: input, shape index: {}]
  %s3 = inlined_call_operand.vmem [shape: f32[1,16], index: 3, kind: input, shape index: {}]
  %s4 = inlined_call_operand.<no memory space> [shape: f32[1,1], index: 4, kind: input, shape index: {}]
  %s5 = inlined_call_operand.hbm [shape: f32[1,512], index: 5, kind: output, shape index: {}]
  %s6 = sld [smem:[#allocation0]]
  $region57: #{tpu_custom_call.1} parent=0
    _
  %s8 = ssub.s32 1, %s6
  %s9 = scalar_select 0, %s8, %s6
  %v10 = vstv %s4
  %11 = vst [vmem:[#allocation2] sm:$0x1] %v10
  $region1: #{tpu_custom_call.1} parent=0
    #allocation3 [shape = 'u8[4096]{0}', space=vmem, size = 0x1000, scoped, tag = 'input window, operand 0']
    #allocation4 [shape = 's32[2]{0}', space=sflag, size = 0x8, scoped, tag = 'scoped memory for tpu_custom_call.1']
    #allocation5 [shape = 's32[2]{0}', space=sflag, size = 0x8, scoped, tag = 'scoped memory for tpu_custom_call.1']
    #allocation6 [shape = 'u8[2048]{0}', space=vmem, size = 0x800, scoped, tag = 'output window, operand 0']
    %12 = vsyncpa [#allocation4], 0
    %s13 = scalar_lea.sflag [#allocation4], 1
    %14 = vsyncpa %s13, 0
    %15 = vsyncpa [#allocation5], 0
    %s16 = scalar_lea.sflag [#allocation5], 1
    %17 = vsyncpa %s16, 0
    loop: start=0, step=1, limit=4
    $region2: #{tpu_custom_call.1} parent=1 // loop_pre_header
      _
    $region3: #{tpu_custom_call.1} parent=1 // loop_header
      %s19 = sphi 0, %s23
      %p20 = scmp.ge.s32.totalorder %s19, 4
      %s29 = sphi 0, %s31
      %s32 = sphi 0, %s29
      %s33 = sphi 0, %s32
      %s49 = sphi 0, %s33
      %s53 = sphi 0, %s53
      %s55 = sphi 0, %s53
      %s56 = sphi 0, %s55
      %s70 = sphi 0, %s56
      %s74 = sphi 0, %s74
      %s76 = sphi 0, %s74
      %s77 = sphi 0, %s76
      %s91 = sphi 0, %s77
      %s95 = sphi 0, %s95
      %s97 = sphi 0, %s95
      %s98 = sphi 0, %s97
      %s112 = sphi 0, %s98
      %s116 = sphi 0, %s116
      %s118 = sphi 0, %s116
      %s119 = sphi 0, %s118
      %s133 = sphi 0, %s119
      %s139 = sphi 0, %s141
      %s142 = sphi 0, %s139
      %s143 = sphi 0, %s142
      %s159 = sphi 0, %s143
    $region4: #{tpu_custom_call.1} parent=1 // loop_header_branch
      %22 = sbr.rel (%p20) target = $region8
    $region5: #{tpu_custom_call.1} parent=1 // loop_body
      %s24 = ssub.s32 %s19, 1
      %s25 = ssub.s32 %s19, 2
      %s26 = sadd.s32 %s19, 1
      %s27 = ssub.s32 %s19, %s26
      %p28 = scmp.eq.s32.totalorder %s27, 0
      %s30 = sadd.s32 %s29, 1
      %s31 = scalar_select %p28, %s29, %s30
      %p34 = pneg %p28
      %p35 = scmp.eq.s32.totalorder %s19, 1
      %p36 = por %p34, %p35
      %p37 = scmp.ne.s32.totalorder %s29, %s32
      %p38 = scmp.eq.s32.totalorder %s19, 0
      %p39 = por %p37, %p38
      %p40 = scmp.ne.s32.totalorder %s29, %s32
      %p41 = scmp.eq.s32.totalorder %s24, 1
      %p42 = por %p40, %p41
      %p43 = scmp.ne.s32.totalorder %s32, %s33
      %p44 = scmp.eq.s32.totalorder %s24, 0
      %p45 = por %p43, %p44
      %p46 = scmp.ne.s32.totalorder %s32, %s33
      %p47 = scmp.eq.s32.totalorder %s25, 1
      %p48 = por %p46, %p47
      %p50 = scmp.ne.s32.totalorder %s33, %s49
      %p51 = scmp.eq.s32.totalorder %s25, 0
      %p52 = por %p50, %p51
      %s54 = sadd.s32 %s53, 1
      %p57 = scmp.eq.s32.totalorder %s19, 1
      %p58 = scmp.ne.s32.totalorder %s53, %s55
      %p59 = scmp.eq.s32.totalorder %s19, 0
      %p60 = por %p58, %p59
      %p61 = scmp.ne.s32.totalorder %s53, %s55
      %p62 = scmp.eq.s32.totalorder %s24, 1
      %p63 = por %p61, %p62
      %p64 = scmp.ne.s32.totalorder %s55, %s56
      %p65 = scmp.eq.s32.totalorder %s24, 0
      %p66 = por %p64, %p65
      %p67 = scmp.ne.s32.totalorder %s55, %s56
      %p68 = scmp.eq.s32.totalorder %s25, 1
      %p69 = por %p67, %p68
      %p71 = scmp.ne.s32.totalorder %s56, %s70
      %p72 = scmp.eq.s32.totalorder %s25, 0
      %p73 = por %p71, %p72
      %s75 = sadd.s32 %s74, 1
      %p78 = scmp.eq.s32.totalorder %s19, 1
      %p79 = scmp.ne.s32.totalorder %s74, %s76
      %p80 = scmp.eq.s32.totalorder %s19, 0
      %p81 = por %p79, %p80
      %p82 = scmp.ne.s32.totalorder %s74, %s76
      %p83 = scmp.eq.s32.totalorder %s24, 1
      %p84 = por %p82, %p83
      %p85 = scmp.ne.s32.totalorder %s76, %s77
      %p86 = scmp.eq.s32.totalorder %s24, 0
      %p87 = por %p85, %p86
      %p88 = scmp.ne.s32.totalorder %s76, %s77
      %p89 = scmp.eq.s32.totalorder %s25, 1
      %p90 = por %p88, %p89
      %p92 = scmp.ne.s32.totalorder %s77, %s91
      %p93 = scmp.eq.s32.totalorder %s25, 0
      %p94 = por %p92, %p93
      %s96 = sadd.s32 %s95, 1
      %p99 = scmp.eq.s32.totalorder %s19, 1
      %p100 = scmp.ne.s32.totalorder %s95, %s97
      %p101 = scmp.eq.s32.totalorder %s19, 0
      %p102 = por %p100, %p101
      %p103 = scmp.ne.s32.totalorder %s95, %s97
      %p104 = scmp.eq.s32.totalorder %s24, 1
      %p105 = por %p103, %p104
      %p106 = scmp.ne.s32.totalorder %s97, %s98
      %p107 = scmp.eq.s32.totalorder %s24, 0
      %p108 = por %p106, %p107
      %p109 = scmp.ne.s32.totalorder %s97, %s98
      %p110 = scmp.eq.s32.totalorder %s25, 1
      %p111 = por %p109, %p110
      %p113 = scmp.ne.s32.totalorder %s98, %s112
      %p114 = scmp.eq.s32.totalorder %s25, 0
      %p115 = por %p113, %p114
      %s117 = sadd.s32 %s116, 1
      %p120 = scmp.eq.s32.totalorder %s19, 1
      %p121 = scmp.ne.s32.totalorder %s116, %s118
      %p122 = scmp.eq.s32.totalorder %s19, 0
      %p123 = por %p121, %p122
      %p124 = scmp.ne.s32.totalorder %s116, %s118
      %p125 = scmp.eq.s32.totalorder %s24, 1
      %p126 = por %p124, %p125
      %p127 = scmp.ne.s32.totalorder %s118, %s119
      %p128 = scmp.eq.s32.totalorder %s24, 0
      %p129 = por %p127, %p128
      %p130 = scmp.ne.s32.totalorder %s118, %s119
      %p131 = scmp.eq.s32.totalorder %s25, 1
      %p132 = por %p130, %p131
      %p134 = scmp.ne.s32.totalorder %s119, %s133
      %p135 = scmp.eq.s32.totalorder %s25, 0
      %p136 = por %p134, %p135
      %s137 = ssub.s32 %s19, %s26
      %p138 = scmp.eq.s32.totalorder %s137, 0
      %s140 = sadd.s32 %s139, 1
      %s141 = scalar_select %p138, %s139, %s140
      %p144 = pneg %p138
      %p145 = scmp.eq.s32.totalorder %s19, 1
      %p146 = por %p144, %p145
      %p147 = scmp.ne.s32.totalorder %s139, %s142
      %p148 = scmp.eq.s32.totalorder %s19, 0
      %p149 = por %p147, %p148
      %p150 = scmp.ne.s32.totalorder %s139, %s142
      %p151 = scmp.eq.s32.totalorder %s24, 1
      %p152 = por %p150, %p151
      %p153 = scmp.ne.s32.totalorder %s142, %s143
      %p154 = scmp.eq.s32.totalorder %s24, 0
      %p155 = por %p153, %p154
      %p156 = scmp.ne.s32.totalorder %s142, %s143
      %p157 = scmp.eq.s32.totalorder %s25, 1
      %p158 = por %p156, %p157
      %p160 = scmp.ne.s32.totalorder %s143, %s159
      %p161 = scmp.eq.s32.totalorder %s25, 0
      %p162 = por %p160, %p161
      %p163 = scmp.le.s32.totalorder 1, %s19
      %p164 = scmp.lt.s32.totalorder %s19, 3
      %p165 = pnand %p163, %p164
      %p166 = pneg %p165
      // Predicated region
      $region9: #{tpu_custom_call.1} parent=5 // pred_check
        _
      $region10: #{tpu_custom_call.1} parent=5 // pred_check_branch
        %168 = sbr.rel (%p165) target = $region12
      $region11: #{tpu_custom_call.1} parent=5 // pred_region
        %s169 = ssub.s32 %s19, 1
        // Predicated region
        $region13: #{tpu_custom_call.1} parent=11 // pred_check
          %p170 = pneg %p66
        $region14: #{tpu_custom_call.1} parent=11 // pred_check_branch
          %172 = sbr.rel (%p170) target = $region16
        $region15: #{tpu_custom_call.1} parent=11 // pred_region
          _
        $region16: #{tpu_custom_call.1} parent=11 // pred_fallthru
          _
        // Predicated region
        $region17: #{tpu_custom_call.1} parent=11 // pred_check
          %p173 = pneg %p87
        $region18: #{tpu_custom_call.1} parent=11 // pred_check_branch
          %175 = sbr.rel (%p173) target = $region20
        $region19: #{tpu_custom_call.1} parent=11 // pred_region
          _
        $region20: #{tpu_custom_call.1} parent=11 // pred_fallthru
          _
        // Predicated region
        $region21: #{tpu_custom_call.1} parent=11 // pred_check
          %p176 = pneg %p108
        $region22: #{tpu_custom_call.1} parent=11 // pred_check_branch
          %178 = sbr.rel (%p176) target = $region24
        $region23: #{tpu_custom_call.1} parent=11 // pred_region
          _
        $region24: #{tpu_custom_call.1} parent=11 // pred_fallthru
          _
        // Predicated region
        $region25: #{tpu_custom_call.1} parent=11 // pred_check
          %p179 = pneg %p129
        $region26: #{tpu_custom_call.1} parent=11 // pred_check_branch
          %181 = sbr.rel (%p179) target = $region28
        $region27: #{tpu_custom_call.1} parent=11 // pred_region
          _
        $region28: #{tpu_custom_call.1} parent=11 // pred_fallthru
          _
      $region12: #{tpu_custom_call.1} parent=5 // pred_fallthru
        _
      %p182 = scmp.lt.s32.totalorder %s19, 2
      // Predicated region
      $region29: #{tpu_custom_call.1} parent=5 // pred_check
        %p183 = pneg %p182
      $region30: #{tpu_custom_call.1} parent=5 // pred_check_branch
        %185 = sbr.rel (%p183) target = $region32
      $region31: #{tpu_custom_call.1} parent=5 // pred_region
        // Predicated region
        $region33: #{tpu_custom_call.1} parent=31 // pred_check
          %p186 = pneg %p39
        $region34: #{tpu_custom_call.1} parent=31 // pred_check_branch
          %188 = sbr.rel (%p186) target = $region36
        $region35: #{tpu_custom_call.1} parent=31 // pred_region
          %s189 = sand.u32 %s29, 1
          %s190 = scalar_lea.sflag [#allocation4], %s189
          %s191 = sand.u32 %s29, 1
          %s192 = smul.addr %s191, 4
          %s193 = scalar_lea.vmem [#allocation3], %s192
          %s194 = smul.u32 2, %s19
          %196 = vsyncadd %s190, 0
          %s197 = smul.addr %s194, 2
          %s198 = scalar_lea.hbm %s0, %s197
          %s200 = sshll.u32 %s198, 4
          %s201 = int_to_ptr.hbm [resolvable:$true] %s200
          %s202 = sshll.u32 %s193, 4
          %s203 = int_to_ptr.vmem [resolvable:$true] %s202
          %205 = dma.hbm_to_vmem [thread:$0]  %s201, 64, %s203, %s190
        $region36: #{tpu_custom_call.1} parent=31 // pred_fallthru
          _
      $region32: #{tpu_custom_call.1} parent=5 // pred_fallthru
        _
      %p206 = scmp.le.s32.totalorder 1, %s19
      %p207 = scmp.lt.s32.totalorder %s19, 3
      %p208 = pnand %p206, %p207
      %p209 = pneg %p208
      // Predicated region
      $region37: #{tpu_custom_call.1} parent=5 // pred_check
        _
      $region38: #{tpu_custom_call.1} parent=5 // pred_check_branch
        %211 = sbr.rel (%p208) target = $region40
      $region39: #{tpu_custom_call.1} parent=5 // pred_region
        %s212 = ssub.s32 %s19, 1
        %s213 = sand.u32 %s32, 1
        %s214 = scalar_lea.sflag [#allocation4], %s213
        %s215 = sand.u32 %s32, 1
        %s216 = smul.addr %s215, 4
        %s217 = scalar_lea.vmem [#allocation3], %s216
        // Predicated region
        $region41: #{tpu_custom_call.1} parent=39 // pred_check
          %p218 = pneg %p45
        $region42: #{tpu_custom_call.1} parent=39 // pred_check_branch
          %220 = sbr.rel (%p218) target = $region44
        $region43: #{tpu_custom_call.1} parent=39 // pred_region
          %222 = dma.done %s214, 64
        $region44: #{tpu_custom_call.1} parent=39 // pred_fallthru
          _
        %s223 = sand.u32 %s32, 1
        %s224 = scalar_lea.sflag [#allocation4], %s223
        %s225 = sand.u32 %s32, 1
        %s226 = smul.addr %s225, 4
        %s227 = scalar_lea.vmem [#allocation3], %s226
        %p228 = pneg %p45
        %p229 = pneg %p42
        %p230 = pneg %p66
        %p231 = pneg %p63
        %p232 = pneg %p87
        %p233 = pneg %p84
        %p234 = pneg %p108
        %p235 = pneg %p105
        %p236 = pneg %p129
        %p237 = pneg %p126
        %p238 = pneg %p155
        %p239 = pneg %p152
        %s240 = sand.u32 %s142, 1
        %s241 = scalar_lea.sflag [#allocation5], %s240
        %s242 = sand.u32 %s142, 1
        %s243 = smul.addr %s242, 2
        %s244 = scalar_lea.vmem [#allocation6], %s243
        %s245 = smul.u32 2, %s24
        %s246 = smul.u32 2, %s24
        %v247 = vld [vmem:[%s217] sm:$0xf]
        %v248 = vld [vmem:[%s1] sm:$0xff]
        %v249 = vld [vmem:[%s1 + $0x8] sm:$0xff]
        %251 = vset.pattern.permute.xlu0 2
        %252 = vperm.xlu0 %251, %v248
        %v253 = vpop.permute.xlu0 %252
        %256 = vset.pattern.permute.xlu0 2
        %257 = vperm.xlu0 %256, %v249
        %v258 = vpop.permute.xlu0 %257
        %261 = vst [vmem:[#allocation1] ss:$4 sm:$0xff] %v247
        %v262 = vld.sshfl [vmem:[#allocation1] sm:$0xff pattern:$0x73625140]
        %v263 = vld.sshfl [vmem:[#allocation1 + $0x8] sm:$0xff pattern:$0x73625140]
        %vm264 = vcmask 15360
        %v265 = vsel %vm264, %v248, 0
        %v267 = vsel %vm264, %v249, 0
        %vm269 = vcmask 1041408
        %v270 = vsel %vm269, %v262, 0
        %v272 = vsel %vm269, %v263, 0
        %274 = vmatpush.msra.mxu0 0.0
        %275 = vmatpush.msra.mxu0 0.0
        %276 = vmatpush.msra.mxu0 0.0
        %277 = vmatpush.msra.mxu0 0.0
        %278 = vmatpush.msra.mxu0 0.0
        %279 = vmatpush.msra.mxu0 0.0
        %280 = vmatpush.msra.mxu0 0.0
        %281 = vmatpush.msra.mxu0 0.0
        %282 = vmatpush.msra.mxu0 0.0
        %283 = vmatpush.msra.mxu0 0.0
        %284 = vmatpush.msra.mxu0 0.0
        %285 = vmatpush.msra.mxu0 0.0
        %286 = vmatpush.msra.mxu0 0.0
        %287 = vmatpush.msra.mxu0 0.0
        %288 = vmatpush.msra.mxu0 0.0
        %289 = vmatpush.msra.mxu0 %v270
        %290 = vmatmul.f32.gmra.mxu0 %v265
        %v291 = vpop.f32.mrf.mxu0
        %v292 = vadd.f32 %v253, %v291
        %293 = vmatmul.f32.gmra.mxu0 %v267
        %v294 = vpop.f32.mrf.mxu0
        %v295 = vadd.f32 %v258, %v294
        %296 = vdwg.mxu0
        %297 = vmatpush.msra.mxu0 0.0
        %298 = vmatpush.msra.mxu0 0.0
        %299 = vmatpush.msra.mxu0 0.0
        %300 = vmatpush.msra.mxu0 0.0
        %301 = vmatpush.msra.mxu0 0.0
        %302 = vmatpush.msra.mxu0 0.0
        %303 = vmatpush.msra.mxu0 0.0
        %304 = vmatpush.msra.mxu0 0.0
        %305 = vmatpush.msra.mxu0 0.0
        %306 = vmatpush.msra.mxu0 0.0
        %307 = vmatpush.msra.mxu0 0.0
        %308 = vmatpush.msra.mxu0 0.0
        %309 = vmatpush.msra.mxu0 0.0
        %310 = vmatpush.msra.mxu0 0.0
        %311 = vmatpush.msra.mxu0 0.0
        %312 = vmatpush.msra.mxu0 %v272
        %313 = vmatmul.f32.gmra.mxu0 %v265
        %v314 = vpop.f32.mrf.mxu0
        %v315 = vadd.f32 %v253, %v314
        %316 = vmatmul.f32.gmra.mxu0 %v267
        %v317 = vpop.f32.mrf.mxu0
        %v318 = vadd.f32 %v258, %v317
        %319 = vdwg.mxu0
        %v320 = vmul.f32 %v292, 0.01
        %v321 = vmul.f32 %v315, 0.01
        %v322 = vmul.f32 %v295, 0.01
        %v323 = vmul.f32 %v318, 0.01
        %v324 = vmax.f32 %v292, %v320
        %v325 = vmax.f32 %v315, %v321
        %v326 = vmax.f32 %v295, %v322
        %v327 = vmax.f32 %v318, %v323
        %v328 = vld [vmem:[%s2] sm:$0xff]
        %v329 = vld [vmem:[%s2 + $0x8] sm:$0xff]
        %330 = vset.pattern.permute.xlu0 3
        %331 = vperm.xlu0 %330, %v248
        %v332 = vpop.permute.xlu0 %331
        %334 = vset.pattern.permute.xlu0 3
        %335 = vperm.xlu0 %334, %v249
        %v336 = vpop.permute.xlu0 %335
        %vm338 = vcmask 130048
        %v340 = vsel %vm338, %v328, 0
        %v343 = vsel %vm338, %v329, 0
        %345 = vmatpush.msra.mxu0 0.0
        %346 = vmatpush.msra.mxu0 0.0
        %347 = vmatpush.msra.mxu0 0.0
        %348 = vmatpush.msra.mxu0 0.0
        %349 = vmatpush.msra.mxu0 0.0
        %350 = vmatpush.msra.mxu0 0.0
        %351 = vmatpush.msra.mxu0 0.0
        %352 = vmatpush.msra.mxu0 0.0
        %353 = vmatpush.msra.mxu0 0.0
        %354 = vmatpush.msra.mxu0 0.0
        %355 = vmatpush.msra.mxu0 0.0
        %356 = vmatpush.msra.mxu0 0.0
        %357 = vmatpush.msra.mxu0 0.0
        %358 = vmatpush.msra.mxu0 0.0
        %359 = vmatpush.msra.mxu0 %v326
        %360 = vmatpush.msra.mxu0 %v324
        %361 = vmatmul.f32.gmra.mxu0 %v340
        %v362 = vpop.f32.mrf.mxu0
        %v363 = vadd.f32 %v332, %v362
        %364 = vmatmul.f32.gmra.mxu0 %v343
        %v365 = vpop.f32.mrf.mxu0
        %v366 = vadd.f32 %v336, %v365
        %367 = vdwg.mxu0
        %368 = vmatpush.msra.mxu0 0.0
        %369 = vmatpush.msra.mxu0 0.0
        %370 = vmatpush.msra.mxu0 0.0
        %371 = vmatpush.msra.mxu0 0.0
        %372 = vmatpush.msra.mxu0 0.0
        %373 = vmatpush.msra.mxu0 0.0
        %374 = vmatpush.msra.mxu0 0.0
        %375 = vmatpush.msra.mxu0 0.0
        %376 = vmatpush.msra.mxu0 0.0
        %377 = vmatpush.msra.mxu0 0.0
        %378 = vmatpush.msra.mxu0 0.0
        %379 = vmatpush.msra.mxu0 0.0
        %380 = vmatpush.msra.mxu0 0.0
        %381 = vmatpush.msra.mxu0 0.0
        %382 = vmatpush.msra.mxu0 %v327
        %383 = vmatpush.msra.mxu0 %v325
        %384 = vmatmul.f32.gmra.mxu0 %v340
        %v385 = vpop.f32.mrf.mxu0
        %v386 = vadd.f32 %v332, %v385
        %387 = vmatmul.f32.gmra.mxu0 %v343
        %v388 = vpop.f32.mrf.mxu0
        %v389 = vadd.f32 %v336, %v388
        %390 = vdwg.mxu0
        %v391 = vmul.f32 %v363, 0.01
        %v392 = vmul.f32 %v386, 0.01
        %v393 = vmul.f32 %v366, 0.01
        %v394 = vmul.f32 %v389, 0.01
        %v395 = vmax.f32 %v363, %v391
        %v396 = vmax.f32 %v386, %v392
        %v397 = vmax.f32 %v366, %v393
        %v398 = vmax.f32 %v389, %v394
        %v399 = vld [vmem:[%s3] sm:$0x1]
        %v400 = vld [vmem:[#allocation2] sm:$0x1]
        %402 = vset.pattern.permute.xlu0 0
        %403 = vperm.xlu0 %402, %v400
        %v404 = vpop.permute.xlu0 %403
        %v406 = vperm.slane %v404, 0
        %v408 = vsel %vm338, %v399, 0
        %410 = vmatpush.msra.mxu0 0.0
        %411 = vmatpush.msra.mxu0 0.0
        %412 = vmatpush.msra.mxu0 0.0
        %413 = vmatpush.msra.mxu0 0.0
        %414 = vmatpush.msra.mxu0 0.0
        %415 = vmatpush.msra.mxu0 0.0
        %416 = vmatpush.msra.mxu0 0.0
        %417 = vmatpush.msra.mxu0 0.0
        %418 = vmatpush.msra.mxu0 0.0
        %419 = vmatpush.msra.mxu0 0.0
        %420 = vmatpush.msra.mxu0 0.0
        %421 = vmatpush.msra.mxu0 0.0
        %422 = vmatpush.msra.mxu0 0.0
        %423 = vmatpush.msra.mxu0 0.0
        %424 = vmatpush.msra.mxu0 %v397
        %425 = vmatpush.msra.mxu0 %v395
        %426 = vmatmul.f32.gmra.mxu0 %v408
        %v427 = vpop.f32.mrf.mxu0
        %v428 = vadd.f32 %v406, %v427
        %429 = vdwg.mxu0
        %430 = vmatpush.msra.mxu0 0.0
        %431 = vmatpush.msra.mxu0 0.0
        %432 = vmatpush.msra.mxu0 0.0
        %433 = vmatpush.msra.mxu0 0.0
        %434 = vmatpush.msra.mxu0 0.0
        %435 = vmatpush.msra.mxu0 0.0
        %436 = vmatpush.msra.mxu0 0.0
        %437 = vmatpush.msra.mxu0 0.0
        %438 = vmatpush.msra.mxu0 0.0
        %439 = vmatpush.msra.mxu0 0.0
        %440 = vmatpush.msra.mxu0 0.0
        %441 = vmatpush.msra.mxu0 0.0
        %442 = vmatpush.msra.mxu0 0.0
        %443 = vmatpush.msra.mxu0 0.0
        %444 = vmatpush.msra.mxu0 %v398
        %445 = vmatpush.msra.mxu0 %v396
        %446 = vmatmul.f32.gmra.mxu0 %v408
        %v447 = vpop.f32.mrf.mxu0
        %v448 = vadd.f32 %v406, %v447
        %449 = vdwg.mxu0
        %v450 = vmul.f32 %v428, 0.01
        %v451 = vmul.f32 %v448, 0.01
        %v452 = vmax.f32 %v428, %v450
        %v453 = vmax.f32 %v448, %v451
        %v456 = vrot.slane %v453, 7
        %vm457 = vcmask 1040384
        %v458 = vsel %vm457, %v452, %v456
        %v460 = vlaneseq
        %vm461 = vcmp.ge.s32.totalorder %v460, 0
        %vm462 = vcmp.lt.s32.totalorder %v460, 256
        %vm463 = vmand %vm461, %vm462
        %464 = vst.msk [vmem:[%s244] sm:$0x3] %vm463, %v458
        %s465 = sand.u32 %s142, 1
        %s466 = scalar_lea.sflag [#allocation5], %s465
        %s467 = sand.u32 %s142, 1
        %s468 = smul.addr %s467, 2
        %s469 = scalar_lea.vmem [#allocation6], %s468
        // Predicated region
        $region45: #{tpu_custom_call.1} parent=39 // pred_check
          %p470 = pneg %p152
        $region46: #{tpu_custom_call.1} parent=39 // pred_check_branch
          %472 = sbr.rel (%p470) target = $region48
        $region47: #{tpu_custom_call.1} parent=39 // pred_region
          %s473 = smul.u32 2, %s24
          %475 = vsyncadd %s466, 0
          %s476 = scalar_lea.hbm %s5, %s473
          %s478 = sshll.u32 %s469, 4
          %s479 = int_to_ptr.vmem [resolvable:$true] %s478
          %s480 = sshll.u32 %s476, 4
          %s481 = int_to_ptr.hbm [resolvable:$true] %s480
          %483 = dma.vmem_to_hbm [thread:$0]  %s479, 32, %s481, %s466
        $region48: #{tpu_custom_call.1} parent=39 // pred_fallthru
          _
      $region40: #{tpu_custom_call.1} parent=5 // pred_fallthru
        _
      %p484 = scmp.le.s32.totalorder 2, %s19
      // Predicated region
      $region49: #{tpu_custom_call.1} parent=5 // pred_check
        %p485 = pneg %p484
      $region50: #{tpu_custom_call.1} parent=5 // pred_check_branch
        %487 = sbr.rel (%p485) target = $region52
      $region51: #{tpu_custom_call.1} parent=5 // pred_region
        %s488 = ssub.s32 %s19, 2
        // Predicated region
        $region53: #{tpu_custom_call.1} parent=51 // pred_check
          %p489 = pneg %p158
        $region54: #{tpu_custom_call.1} parent=51 // pred_check_branch
          %491 = sbr.rel (%p489) target = $region56
        $region55: #{tpu_custom_call.1} parent=51 // pred_region
          %s492 = sand.u32 %s143, 1
          %s493 = scalar_lea.sflag [#allocation5], %s492
          %s494 = sand.u32 %s143, 1
          %s495 = smul.addr %s494, 2
          %s496 = scalar_lea.vmem [#allocation6], %s495
          %498 = dma.done %s493, 32
        $region56: #{tpu_custom_call.1} parent=51 // pred_fallthru
          _
      $region52: #{tpu_custom_call.1} parent=5 // pred_fallthru
        _
    $region6: #{tpu_custom_call.1} parent=1 // loop_footer
      %s23 = sadd.s32 1, %s19
    $region7: #{tpu_custom_call.1} parent=1 // loop_footer_branch
      %18 = sbr.rel target = $region3
    $region8: #{tpu_custom_call.1} parent=1 // loop_exit
      _
    %499 = vsyncpa [#allocation4], 1
    %s500 = scalar_lea.sflag [#allocation4], 1
    %501 = vsyncpa %s500, 1
    %502 = vsyncpa [#allocation5], 1
    %s503 = scalar_lea.sflag [#allocation5], 1
    %504 = vsyncpa %s503, 1

</llo_original>
